<compile_context>
chip_gen: v7x
topology: tpu7x:2x2x1
jax: 0.10.0
libtpu: 0.0.40
codegen_flags: <defaults>
</compile_context>

<pallas_src>
import functools

import jax
import jax.numpy as jnp
import numpy as np
from jax.experimental import pallas as pl
from jax.experimental.pallas import tpu as pltpu  # noqa: F401  (TPU backend)

E = 16          # embed dim
H = 32          # ffn hidden dim
LN_EPS = 1e-5

# Packed parameter slab layout, (88, 128) fp32 (every block lane-0 / 8-row aligned):
#   rows [ 0:16] cols [0:48] -> Wq | Wk | Wv   (x @ W convention, i.e. PyTorch W^T)
#   rows [16:32] cols [0:16] -> Wo (attention out-proj)
#   rows [32:48] cols [0:32] -> W1 (Linear 16->32)
#   rows [48:80] cols [0:16] -> W2 (Linear 32->16)
#   row 80: bq|bk|bv (48)    row 81: bo (16)
#   row 82: LN1 gamma        row 83: LN1 beta
#   row 84: b1 (32)          row 85: b2 (16)
#   row 86: LN2 gamma        row 87: LN2 beta
_BIAS_ROW = 3 * E + H          # 80
_SLAB_ROWS = _BIAS_ROW + 8     # 88


def _encoder_layer_kernel(x_ref, p_ref, out_ref, *, batch):
    xf = x_ref[...]                                 # (N, E) token-major rows
    n = xf.shape[0]

    # ---- static slices of the packed parameter slab (free views) ----------
    wqkv = p_ref[0:E, 0:3 * E]                      # (E, 3E)
    wo = p_ref[E:2 * E, 0:E]                        # (E, E)
    w1 = p_ref[2 * E:3 * E, 0:H]                    # (E, H)
    w2 = p_ref[3 * E:3 * E + H, 0:E]                # (H, E)
    r = _BIAS_ROW
    bqkv = p_ref[r + 0:r + 1, 0:3 * E]
    bo = p_ref[r + 1:r + 2, 0:E]
    g1, be1 = p_ref[r + 2:r + 3, 0:E], p_ref[r + 3:r + 4, 0:E]
    b1 = p_ref[r + 4:r + 5, 0:H]
    b2 = p_ref[r + 5:r + 6, 0:E]
    g2, be2 = p_ref[r + 6:r + 7, 0:E], p_ref[r + 7:r + 8, 0:E]

    # ---- fused QKV projection: one MXU push for all tokens ----------------
    qkv = jnp.dot(xf, wqkv, preferred_element_type=jnp.float32) + bqkv       # (N, 3E)
    scale = 1.0 / jnp.sqrt(jnp.float32(E))
    q = qkv[:, 0:E] * scale                         # scale after bias (PyTorch MHA)
    k = qkv[:, E:2 * E]
    v = qkv[:, 2 * E:3 * E]

    # ---- attention over all tokens at once; in-kernel block-diagonal mask
    #      keeps each token attending only within its own batch element -----
    s = jax.lax.dot_general(q, k, (((1,), (1,)), ((), ())),
                            preferred_element_type=jnp.float32)              # (N, N)
    row_b = jax.lax.broadcasted_iota(jnp.int32, (n, n), 0) % batch
    col_b = jax.lax.broadcasted_iota(jnp.int32, (n, n), 1) % batch
    s = jnp.where(row_b == col_b, s, -1e30)
    s = s - jnp.max(s, axis=-1, keepdims=True)
    p = jnp.exp(s)
    p = p * pl.reciprocal(jnp.sum(p, axis=-1, keepdims=True), approx=True)
    attn = jnp.dot(p, v, preferred_element_type=jnp.float32)                 # (N, E)
    attn = jnp.dot(attn, wo, preferred_element_type=jnp.float32) + bo

    # ---- residual + LayerNorm 1 (two independent reductions) --------------
    y = xf + attn
    mu = jnp.mean(y, axis=-1, keepdims=True)
    msq = jnp.mean(y * y, axis=-1, keepdims=True)
    var = msq - mu * mu
    y = (y - mu) * jax.lax.rsqrt(var + LN_EPS) * g1 + be1

    # ---- feed-forward: Linear(16,32) -> Linear(32,16) -> Tanh -------------
    h = jnp.dot(y, w1, preferred_element_type=jnp.float32) + b1
    ff = jnp.tanh(jnp.dot(h, w2, preferred_element_type=jnp.float32) + b2)

    # ---- residual + LayerNorm 2 (two independent reductions) --------------
    z = y + ff
    mu2 = jnp.mean(z, axis=-1, keepdims=True)
    msq2 = jnp.mean(z * z, axis=-1, keepdims=True)
    var2 = msq2 - mu2 * mu2
    out_ref[...] = (z - mu2) * jax.lax.rsqrt(var2 + LN_EPS) * g2 + be2


@jax.jit
def encoder_layer_pallas(x_sbe, p_slab):
    """x_sbe: (S, B, E) fp32, PyTorch nn.MultiheadAttention default layout."""
    S, B, E_ = x_sbe.shape
    n = S * B
    # Row-major collapse of (S, B) -> tokens: free (no transpose, no HBM pass).
    x2 = x_sbe.reshape(n, E_)

    flops = 2 * n * (3 * E * E + E * E + 2 * E * H) + 4 * n * n * E
    transcendentals = n * n + n * E + 3 * n
    bytes_accessed = 4 * (2 * n * E_ + p_slab.size)   # mask term removed

    kernel = functools.partial(_encoder_layer_kernel, batch=B)
    out2 = pl.pallas_call(
        kernel,
        out_shape=jax.ShapeDtypeStruct((n, E_), jnp.float32),
        cost_estimate=pl.CostEstimate(
            flops=flops,
            transcendentals=transcendentals,
            bytes_accessed=bytes_accessed,
        ),
    )(x2, p_slab)

    # NOTE: if many independent instances of this layer exist, add a leading
    # "parallel" grid axis over instances (2 TCs on v7x) instead of looping
    # pallas_calls; with a single instance the gridless call is optimal.
    return out2.reshape(S, B, E_)


def make_params(key):
    """Deterministic synthetic parameters (shapes match the PyTorch module)."""
    keys = jax.random.split(key, 12)
    s = 0.2
    return {
        # attention in/out projections (stored as x @ W, i.e. PyTorch W^T)
        "wq": s * jax.random.normal(keys[0], (E, E), jnp.float32),
        "wk": s * jax.random.normal(keys[1], (E, E), jnp.float32),
        "wv": s * jax.random.normal(keys[2], (E, E), jnp.float32),
        "bq": s * jax.random.normal(keys[3], (E,), jnp.float32),
        "bk": s * jax.random.normal(keys[4], (E,), jnp.float32),
        "bv": s * jax.random.normal(keys[5], (E,), jnp.float32),
        "wo": s * jax.random.normal(keys[6], (E, E), jnp.float32),
        "bo": s * jax.random.normal(keys[7], (E,), jnp.float32),
        # LayerNorm 1
        "g1": jnp.ones((E,), jnp.float32),
        "be1": jnp.zeros((E,), jnp.float32),
        # FFN
        "w1": s * jax.random.normal(keys[8], (E, H), jnp.float32),
        "b1": s * jax.random.normal(keys[9], (H,), jnp.float32),
        "w2": s * jax.random.normal(keys[10], (H, E), jnp.float32),
        "b2": s * jax.random.normal(keys[11], (E,), jnp.float32),
        # LayerNorm 2
        "g2": jnp.ones((E,), jnp.float32),
        "be2": jnp.zeros((E,), jnp.float32),
    }


def pack_params(p):
    """Pack the 16 parameter arrays into ONE lane-padded fp32 slab (single DMA).

    Weight loading note: real nn.MultiheadAttention in_proj_weight /
    out_proj.weight / Linear weights must be transposed into this x@W layout.
    """
    w = np.zeros((_SLAB_ROWS, 128), np.float32)
    w[0:E, 0:3 * E] = np.concatenate(
        [np.asarray(p["wq"]), np.asarray(p["wk"]), np.asarray(p["wv"])], axis=1)
    w[E:2 * E, 0:E] = np.asarray(p["wo"])
    w[2 * E:3 * E, 0:H] = np.asarray(p["w1"])
    w[3 * E:3 * E + H, 0:E] = np.asarray(p["w2"])

    r = _BIAS_ROW
    w[r + 0, 0:3 * E] = np.concatenate(
        [np.asarray(p["bq"]), np.asarray(p["bk"]), np.asarray(p["bv"])])
    w[r + 1, 0:E] = np.asarray(p["bo"])
    w[r + 2, 0:E] = np.asarray(p["g1"])
    w[r + 3, 0:E] = np.asarray(p["be1"])
    w[r + 4, 0:H] = np.asarray(p["b1"])
    w[r + 5, 0:E] = np.asarray(p["b2"])
    w[r + 6, 0:E] = np.asarray(p["g2"])
    w[r + 7, 0:E] = np.asarray(p["be2"])
    return jnp.asarray(w)


def encoder_layer_ref(x_sbe, p):
    """Pure-JAX reference with identical math, for a sanity check."""
    x = jnp.transpose(x_sbe, (1, 0, 2))          # (B, S, E)
    scale = 1.0 / jnp.sqrt(jnp.float32(E))
    q = (x @ p["wq"] + p["bq"]) * scale
    k = x @ p["wk"] + p["bk"]
    v = x @ p["wv"] + p["bv"]
    a = jax.nn.softmax(jnp.einsum("bqe,bke->bqk", q, k), axis=-1)
    attn = jnp.einsum("bqk,bke->bqe", a, v) @ p["wo"] + p["bo"]

    def ln(y, g, b):
        mu = jnp.mean(y, axis=-1, keepdims=True)
        var = jnp.mean(jnp.square(y - mu), axis=-1, keepdims=True)
        return (y - mu) * jax.lax.rsqrt(var + LN_EPS) * g + b

    x = ln(x + attn, p["g1"], p["be1"])
    ff = jnp.tanh((x @ p["w1"] + p["b1"]) @ p["w2"] + p["b2"])
    x = ln(x + ff, p["g2"], p["be2"])
    return jnp.transpose(x, (1, 0, 2))


if __name__ == "__main__":
    key = jax.random.PRNGKey(0)
    k_x, k_p = jax.random.split(key)

    S, B = 8, 2                                   # seq=8, batch=2, embed=16
    x = jax.random.normal(k_x, (S, B, E), jnp.float32)
    params = make_params(k_p)
    p_slab = pack_params(params)

    out = jax.block_until_ready(encoder_layer_pallas(x, p_slab))
    ref = jax.block_until_ready(encoder_layer_ref(x, params))

    assert out.shape == (S, B, E)
    np.testing.assert_allclose(np.asarray(out), np.asarray(ref), rtol=1e-2, atol=1e-2)

    print("KERNEL_OK")
</pallas_src>

<mosaic_0001>
module attributes {stable_mosaic.version = 11 : i64} {
  func.func @_encoder_layer_kernel(%arg0: memref<16x16xf32, #tpu.memory_space<vmem>>, %arg1: memref<88x128xf32, #tpu.memory_space<vmem>>, %arg2: memref<16x16xf32, #tpu.memory_space<vmem>>) attributes {dimension_semantics = [], scalar_prefetch = 0 : i64, scratch_operands = 0 : i64, tpu.core_type = #tpu.core_type<tc>} {
    %c0 = arith.constant 0 : index
    %c0_0 = arith.constant 0 : index
    %0 = vector.load %arg0[%c0, %c0_0] : memref<16x16xf32, #tpu.memory_space<vmem>>, vector<16x16xf32>
    %c0_1 = arith.constant 0 : index
    %c0_2 = arith.constant 0 : index
    %1 = vector.load %arg1[%c0_1, %c0_2] : memref<88x128xf32, #tpu.memory_space<vmem>>, vector<16x48xf32>
    %c16 = arith.constant 16 : index
    %c0_3 = arith.constant 0 : index
    %2 = vector.load %arg1[%c16, %c0_3] : memref<88x128xf32, #tpu.memory_space<vmem>>, vector<16x16xf32>
    %c32 = arith.constant 32 : index
    %c0_4 = arith.constant 0 : index
    %3 = vector.load %arg1[%c32, %c0_4] : memref<88x128xf32, #tpu.memory_space<vmem>>, vector<16x32xf32>
    %c48 = arith.constant 48 : index
    %c0_5 = arith.constant 0 : index
    %4 = vector.load %arg1[%c48, %c0_5] : memref<88x128xf32, #tpu.memory_space<vmem>>, vector<32x16xf32>
    %c80 = arith.constant 80 : index
    %c0_6 = arith.constant 0 : index
    %5 = vector.load %arg1[%c80, %c0_6] : memref<88x128xf32, #tpu.memory_space<vmem>>, vector<1x48xf32>
    %c81 = arith.constant 81 : index
    %c0_7 = arith.constant 0 : index
    %6 = vector.load %arg1[%c81, %c0_7] : memref<88x128xf32, #tpu.memory_space<vmem>>, vector<1x16xf32>
    %c82 = arith.constant 82 : index
    %c0_8 = arith.constant 0 : index
    %7 = vector.load %arg1[%c82, %c0_8] : memref<88x128xf32, #tpu.memory_space<vmem>>, vector<1x16xf32>
    %c83 = arith.constant 83 : index
    %c0_9 = arith.constant 0 : index
    %8 = vector.load %arg1[%c83, %c0_9] : memref<88x128xf32, #tpu.memory_space<vmem>>, vector<1x16xf32>
    %c84 = arith.constant 84 : index
    %c0_10 = arith.constant 0 : index
    %9 = vector.load %arg1[%c84, %c0_10] : memref<88x128xf32, #tpu.memory_space<vmem>>, vector<1x32xf32>
    %c85 = arith.constant 85 : index
    %c0_11 = arith.constant 0 : index
    %10 = vector.load %arg1[%c85, %c0_11] : memref<88x128xf32, #tpu.memory_space<vmem>>, vector<1x16xf32>
    %c86 = arith.constant 86 : index
    %c0_12 = arith.constant 0 : index
    %11 = vector.load %arg1[%c86, %c0_12] : memref<88x128xf32, #tpu.memory_space<vmem>>, vector<1x16xf32>
    %c87 = arith.constant 87 : index
    %c0_13 = arith.constant 0 : index
    %12 = vector.load %arg1[%c87, %c0_13] : memref<88x128xf32, #tpu.memory_space<vmem>>, vector<1x16xf32>
    %cst = arith.constant dense<0.000000e+00> : vector<16x48xf32>
    %13 = tpu.matmul %0, %1, %cst {dimension_numbers = #tpu.dot_dimension_numbers<[1], [0], [0], [1], [0, 0, 1, 1], [], []>} : vector<16x16xf32>, vector<16x48xf32>, vector<16x48xf32> -> vector<16x48xf32>
    %14 = vector.broadcast %5 : vector<1x48xf32> to vector<16x48xf32>
    %15 = arith.addf %13, %14 : vector<16x48xf32>
    %cst_14 = arith.constant 1.600000e+01 : f32
    %16 = math.sqrt %cst_14 : f32
    %cst_15 = arith.constant 1.000000e+00 : f32
    %17 = arith.divf %cst_15, %16 : f32
    %18 = vector.extract_strided_slice %15 {offsets = [0, 0], sizes = [16, 16], strides = [1, 1]} : vector<16x48xf32> to vector<16x16xf32>
    %19 = vector.broadcast %17 : f32 to vector<16x16xf32>
    %20 = arith.mulf %18, %19 : vector<16x16xf32>
    %21 = vector.extract_strided_slice %15 {offsets = [0, 16], sizes = [16, 16], strides = [1, 1]} : vector<16x48xf32> to vector<16x16xf32>
    %22 = vector.extract_strided_slice %15 {offsets = [0, 32], sizes = [16, 16], strides = [1, 1]} : vector<16x48xf32> to vector<16x16xf32>
    %cst_16 = arith.constant dense<0.000000e+00> : vector<16x16xf32>
    %23 = tpu.matmul %20, %21, %cst_16 {dimension_numbers = #tpu.dot_dimension_numbers<[1], [1], [0], [0], [0, 0, 1, 0], [], []>} : vector<16x16xf32>, vector<16x16xf32>, vector<16x16xf32> -> vector<16x16xf32>
    %24 = tpu.iota {dimensions = array<i32: 0>} : vector<16x16xi32>
    %c2_i32 = arith.constant 2 : i32
    %c0_i32 = arith.constant 0 : i32
    %25 = arith.cmpi eq, %c2_i32, %c0_i32 : i32
    %c1_i32 = arith.constant 1 : i32
    %26 = arith.select %25, %c1_i32, %c2_i32 : i32
    %27 = vector.broadcast %26 : i32 to vector<16x16xi32>
    %28 = arith.remsi %24, %27 : vector<16x16xi32>
    %c0_i32_17 = arith.constant 0 : i32
    %29 = vector.broadcast %c0_i32_17 : i32 to vector<16x16xi32>
    %30 = arith.cmpi ne, %28, %29 : vector<16x16xi32>
    %c0_i32_18 = arith.constant 0 : i32
    %31 = vector.broadcast %c0_i32_18 : i32 to vector<16x16xi32>
    %32 = arith.cmpi slt, %28, %31 : vector<16x16xi32>
    %c0_i32_19 = arith.constant 0 : i32
    %33 = arith.cmpi slt, %26, %c0_i32_19 : i32
    %34 = vector.broadcast %33 : i1 to vector<16x16xi1>
    %35 = vector.broadcast %34 : vector<16x16xi1> to vector<16x16xi1>
    %36 = arith.xori %32, %35 : vector<16x16xi1>
    %37 = arith.andi %36, %30 : vector<16x16xi1>
    %38 = vector.broadcast %26 : i32 to vector<16x16xi32>
    %39 = arith.addi %28, %38 : vector<16x16xi32>
    %40 = arith.select %37, %39, %28 : vector<16x16xi1>, vector<16x16xi32>
    %41 = tpu.iota {dimensions = array<i32: 1>} : vector<16x16xi32>
    %c2_i32_20 = arith.constant 2 : i32
    %c0_i32_21 = arith.constant 0 : i32
    %42 = arith.cmpi eq, %c2_i32_20, %c0_i32_21 : i32
    %c1_i32_22 = arith.constant 1 : i32
    %43 = arith.select %42, %c1_i32_22, %c2_i32_20 : i32
    %44 = vector.broadcast %43 : i32 to vector<16x16xi32>
    %45 = arith.remsi %41, %44 : vector<16x16xi32>
    %c0_i32_23 = arith.constant 0 : i32
    %46 = vector.broadcast %c0_i32_23 : i32 to vector<16x16xi32>
    %47 = arith.cmpi ne, %45, %46 : vector<16x16xi32>
    %c0_i32_24 = arith.constant 0 : i32
    %48 = vector.broadcast %c0_i32_24 : i32 to vector<16x16xi32>
    %49 = arith.cmpi slt, %45, %48 : vector<16x16xi32>
    %c0_i32_25 = arith.constant 0 : i32
    %50 = arith.cmpi slt, %43, %c0_i32_25 : i32
    %51 = vector.broadcast %50 : i1 to vector<16x16xi1>
    %52 = vector.broadcast %51 : vector<16x16xi1> to vector<16x16xi1>
    %53 = arith.xori %49, %52 : vector<16x16xi1>
    %54 = arith.andi %53, %47 : vector<16x16xi1>
    %55 = vector.broadcast %43 : i32 to vector<16x16xi32>
    %56 = arith.addi %45, %55 : vector<16x16xi32>
    %57 = arith.select %54, %56, %45 : vector<16x16xi1>, vector<16x16xi32>
    %58 = arith.cmpi eq, %40, %57 : vector<16x16xi32>
    %cst_26 = arith.constant -1.000000e+30 : f32
    %59 = vector.broadcast %cst_26 : f32 to vector<16x16xf32>
    %60 = arith.select %58, %23, %59 : vector<16x16xi1>, vector<16x16xf32>
    %cst_27 = arith.constant dense<0xFF800000> : vector<16xf32>
    %61 = vector.multi_reduction <maximumf>, %60, %cst_27 [1] : vector<16x16xf32> to vector<16xf32>
    %62 = vector.shape_cast %61 : vector<16xf32> to vector<16x1xf32>
    %63 = vector.broadcast %62 : vector<16x1xf32> to vector<16x16xf32>
    %64 = arith.subf %60, %63 : vector<16x16xf32>
    %65 = math.exp %64 : vector<16x16xf32>
    %cst_28 = arith.constant dense<0.000000e+00> : vector<16xf32>
    %66 = vector.multi_reduction <add>, %65, %cst_28 [1] : vector<16x16xf32> to vector<16xf32>
    %67 = vector.shape_cast %66 : vector<16xf32> to vector<16x1xf32>
    %68 = tpu.reciprocal %67 {approx = true} : vector<16x1xf32> -> vector<16x1xf32>
    %69 = vector.broadcast %68 : vector<16x1xf32> to vector<16x16xf32>
    %70 = arith.mulf %65, %69 : vector<16x16xf32>
    %cst_29 = arith.constant dense<0.000000e+00> : vector<16x16xf32>
    %71 = tpu.matmul %70, %22, %cst_29 {dimension_numbers = #tpu.dot_dimension_numbers<[1], [0], [0], [1], [0, 0, 1, 1], [], []>} : vector<16x16xf32>, vector<16x16xf32>, vector<16x16xf32> -> vector<16x16xf32>
    %cst_30 = arith.constant dense<0.000000e+00> : vector<16x16xf32>
    %72 = tpu.matmul %71, %2, %cst_30 {dimension_numbers = #tpu.dot_dimension_numbers<[1], [0], [0], [1], [0, 0, 1, 1], [], []>} : vector<16x16xf32>, vector<16x16xf32>, vector<16x16xf32> -> vector<16x16xf32>
    %73 = vector.broadcast %6 : vector<1x16xf32> to vector<16x16xf32>
    %74 = arith.addf %72, %73 : vector<16x16xf32>
    %75 = arith.addf %0, %74 : vector<16x16xf32>
    %cst_31 = arith.constant dense<0.000000e+00> : vector<16xf32>
    %76 = vector.multi_reduction <add>, %75, %cst_31 [1] : vector<16x16xf32> to vector<16xf32>
    %77 = vector.shape_cast %76 : vector<16xf32> to vector<16x1xf32>
    %cst_32 = arith.constant 1.600000e+01 : f32
    %78 = vector.broadcast %cst_32 : f32 to vector<16x1xf32>
    %79 = arith.divf %77, %78 : vector<16x1xf32>
    %80 = arith.mulf %75, %75 : vector<16x16xf32>
    %cst_33 = arith.constant dense<0.000000e+00> : vector<16xf32>
    %81 = vector.multi_reduction <add>, %80, %cst_33 [1] : vector<16x16xf32> to vector<16xf32>
    %82 = vector.shape_cast %81 : vector<16xf32> to vector<16x1xf32>
    %cst_34 = arith.constant 1.600000e+01 : f32
    %83 = vector.broadcast %cst_34 : f32 to vector<16x1xf32>
    %84 = arith.divf %82, %83 : vector<16x1xf32>
    %85 = arith.mulf %79, %79 : vector<16x1xf32>
    %86 = arith.subf %84, %85 : vector<16x1xf32>
    %87 = vector.broadcast %79 : vector<16x1xf32> to vector<16x16xf32>
    %88 = arith.subf %75, %87 : vector<16x16xf32>
    %cst_35 = arith.constant 9.99999974E-6 : f32
    %89 = vector.broadcast %cst_35 : f32 to vector<16x1xf32>
    %90 = arith.addf %86, %89 : vector<16x1xf32>
    %91 = math.rsqrt %90 : vector<16x1xf32>
    %92 = vector.broadcast %91 : vector<16x1xf32> to vector<16x16xf32>
    %93 = arith.mulf %88, %92 : vector<16x16xf32>
    %94 = vector.broadcast %7 : vector<1x16xf32> to vector<16x16xf32>
    %95 = arith.mulf %93, %94 : vector<16x16xf32>
    %96 = vector.broadcast %8 : vector<1x16xf32> to vector<16x16xf32>
    %97 = arith.addf %95, %96 : vector<16x16xf32>
    %cst_36 = arith.constant dense<0.000000e+00> : vector<16x32xf32>
    %98 = tpu.matmul %97, %3, %cst_36 {dimension_numbers = #tpu.dot_dimension_numbers<[1], [0], [0], [1], [0, 0, 1, 1], [], []>} : vector<16x16xf32>, vector<16x32xf32>, vector<16x32xf32> -> vector<16x32xf32>
    %99 = vector.broadcast %9 : vector<1x32xf32> to vector<16x32xf32>
    %100 = arith.addf %98, %99 : vector<16x32xf32>
    %cst_37 = arith.constant dense<0.000000e+00> : vector<16x16xf32>
    %101 = tpu.matmul %100, %4, %cst_37 {dimension_numbers = #tpu.dot_dimension_numbers<[1], [0], [0], [1], [0, 0, 1, 1], [], []>} : vector<16x32xf32>, vector<32x16xf32>, vector<16x16xf32> -> vector<16x16xf32>
    %102 = vector.broadcast %10 : vector<1x16xf32> to vector<16x16xf32>
    %103 = arith.addf %101, %102 : vector<16x16xf32>
    %104 = math.tanh %103 : vector<16x16xf32>
    %105 = arith.addf %97, %104 : vector<16x16xf32>
    %cst_38 = arith.constant dense<0.000000e+00> : vector<16xf32>
    %106 = vector.multi_reduction <add>, %105, %cst_38 [1] : vector<16x16xf32> to vector<16xf32>
    %107 = vector.shape_cast %106 : vector<16xf32> to vector<16x1xf32>
    %cst_39 = arith.constant 1.600000e+01 : f32
    %108 = vector.broadcast %cst_39 : f32 to vector<16x1xf32>
    %109 = arith.divf %107, %108 : vector<16x1xf32>
    %110 = arith.mulf %105, %105 : vector<16x16xf32>
    %cst_40 = arith.constant dense<0.000000e+00> : vector<16xf32>
    %111 = vector.multi_reduction <add>, %110, %cst_40 [1] : vector<16x16xf32> to vector<16xf32>
    %112 = vector.shape_cast %111 : vector<16xf32> to vector<16x1xf32>
    %cst_41 = arith.constant 1.600000e+01 : f32
    %113 = vector.broadcast %cst_41 : f32 to vector<16x1xf32>
    %114 = arith.divf %112, %113 : vector<16x1xf32>
    %115 = arith.mulf %109, %109 : vector<16x1xf32>
    %116 = arith.subf %114, %115 : vector<16x1xf32>
    %117 = vector.broadcast %109 : vector<16x1xf32> to vector<16x16xf32>
    %118 = arith.subf %105, %117 : vector<16x16xf32>
    %cst_42 = arith.constant 9.99999974E-6 : f32
    %119 = vector.broadcast %cst_42 : f32 to vector<16x1xf32>
    %120 = arith.addf %116, %119 : vector<16x1xf32>
    %121 = math.rsqrt %120 : vector<16x1xf32>
    %122 = vector.broadcast %121 : vector<16x1xf32> to vector<16x16xf32>
    %123 = arith.mulf %118, %122 : vector<16x16xf32>
    %124 = vector.broadcast %11 : vector<1x16xf32> to vector<16x16xf32>
    %125 = arith.mulf %123, %124 : vector<16x16xf32>
    %126 = vector.broadcast %12 : vector<1x16xf32> to vector<16x16xf32>
    %127 = arith.addf %125, %126 : vector<16x16xf32>
    %c0_43 = arith.constant 0 : index
    %c0_44 = arith.constant 0 : index
    %128 = vector.load %arg2[%c0_43, %c0_44] : memref<16x16xf32, #tpu.memory_space<vmem>>, vector<16x16xf32>
    tpu.vector_store %arg2[%c0_43, %c0_44], %127 {strides = array<i32>} : memref<16x16xf32, #tpu.memory_space<vmem>>, vector<16x16xf32>,
    return
  }
}

</mosaic_0001>

<llo_original>
// kernel: encoder_layer_pallas.1
$region0: #{encoder_layer_pallas.1}
  #allocation0 [shape = 'u32[]', space=smem, size = 0x4, offset = 0x4, fixed_abs, tag = 'smem constant byte address 0x4 - core index']
  #allocation1 [shape = 'u32[144,128]{1,0:T(1,128)}', space=vmem, size = 0x12000, scoped, tag = 'internal scratch']
  %s0 = inlined_call_operand.hbm [shape: f32[16,16], index: 0, kind: input, shape index: {}]
  %s1 = inlined_call_operand.hbm [shape: f32[88,128], index: 1, kind: input, shape index: {}]
  %s2 = inlined_call_operand.hbm [shape: f32[16,16], index: 2, kind: output, shape index: {}]
  %s3 = sld [smem:[#allocation0]]
  $region26: #{encoder_layer_pallas.1} parent=0
    _
  %s5 = ssub.s32 1, %s3
  %s6 = scalar_select 0, %s5, %s3
  $region1: #{encoder_layer_pallas.1} parent=0
    #allocation2 [shape = 'u8[8192]{0}', space=vmem, size = 0x2000, scoped, tag = 'input window, operand 0, single buffered']
    #allocation3 [shape = 's32[1]{0}', space=sflag, size = 0x4, scoped, tag = 'scoped memory for encoder_layer_pallas.1']
    #allocation4 [shape = 's32[1]{0}', space=sflag, size = 0x4, scoped, tag = 'scoped memory for encoder_layer_pallas.1']
    #allocation5 [shape = 'u8[45056]{0}', space=vmem, size = 0xb000, scoped, tag = 'input window, operand 1, single buffered']
    #allocation6 [shape = 's32[1]{0}', space=sflag, size = 0x4, scoped, tag = 'scoped memory for encoder_layer_pallas.1']
    #allocation7 [shape = 'u8[8192]{0}', space=vmem, size = 0x2000, scoped, tag = 'output window, operand 0, single buffered']
    %7 = vsyncpa [#allocation3], 0
    %8 = vsyncpa [#allocation6], 0
    %9 = vsyncpa [#allocation4], 0
    // Predicated region
    $region2: #{encoder_layer_pallas.1} parent=1 // pred_check
      _
    $region3: #{encoder_layer_pallas.1} parent=1 // pred_check_branch
      %11 = sbr.rel (0) target = $region5
    $region4: #{encoder_layer_pallas.1} parent=1 // pred_region
      %s13 = ssub.s32 256, 256
      %14 = vsyncadd [#allocation3], %s13
      %s15 = sshll.u32 [#allocation2], 4
      %s16 = int_to_ptr.vmem [resolvable:$true] %s15
      %21 = dma.hbm_to_vmem [thread:$0]  %s0, 256, %s16, [#allocation3], 128, 128, 8
    $region5: #{encoder_layer_pallas.1} parent=1 // pred_fallthru
      _
    // Predicated region
    $region6: #{encoder_layer_pallas.1} parent=1 // pred_check
      _
    $region7: #{encoder_layer_pallas.1} parent=1 // pred_check_branch
      %23 = sbr.rel (0) target = $region9
    $region8: #{encoder_layer_pallas.1} parent=1 // pred_region
      %s25 = ssub.s32 1408, 1408
      %26 = vsyncadd [#allocation6], %s25
      %s27 = sshll.u32 [#allocation5], 4
      %s28 = int_to_ptr.vmem [resolvable:$true] %s27
      %33 = dma.hbm_to_vmem [thread:$0]  %s1, 1408, %s28, [#allocation6], 128, 128, 8
    $region9: #{encoder_layer_pallas.1} parent=1 // pred_fallthru
      _
    // Predicated region
    $region10: #{encoder_layer_pallas.1} parent=1 // pred_check
      _
    $region11: #{encoder_layer_pallas.1} parent=1 // pred_check_branch
      %35 = sbr.rel (0) target = $region13
    $region12: #{encoder_layer_pallas.1} parent=1 // pred_region
      %36 = dma.done [#allocation3], 256
    $region13: #{encoder_layer_pallas.1} parent=1 // pred_fallthru
      _
    // Predicated region
    $region14: #{encoder_layer_pallas.1} parent=1 // pred_check
      _
    $region15: #{encoder_layer_pallas.1} parent=1 // pred_check_branch
      %38 = sbr.rel (0) target = $region17
    $region16: #{encoder_layer_pallas.1} parent=1 // pred_region
      %39 = dma.done [#allocation6], 1408
    $region17: #{encoder_layer_pallas.1} parent=1 // pred_fallthru
      _
    %v40 = vld [vmem:[#allocation2] sm:$0xff]
    %v41 = vld [vmem:[#allocation2 + $0x8] sm:$0xff]
    %v42 = vld [vmem:[#allocation5] sm:$0xff]
    %v43 = vld [vmem:[#allocation5 + $0x8] sm:$0xff]
    %v44 = vld [vmem:[#allocation5 + $0x10] sm:$0xff]
    %v45 = vld [vmem:[#allocation5 + $0x18] sm:$0xff]
    %v46 = vld [vmem:[#allocation5 + $0x20] sm:$0xff]
    %v47 = vld [vmem:[#allocation5 + $0x28] sm:$0xff]
    %v48 = vld [vmem:[#allocation5 + $0x30] sm:$0xff]
    %v49 = vld [vmem:[#allocation5 + $0x38] sm:$0xff]
    %v50 = vld [vmem:[#allocation5 + $0x40] sm:$0xff]
    %v51 = vld [vmem:[#allocation5 + $0x48] sm:$0xff]
    %v52 = vld [vmem:[#allocation5 + $0x50] sm:$0x1]
    %v53 = vld [vmem:[#allocation5 + $0x51] sm:$0x1]
    %v54 = vld [vmem:[#allocation5 + $0x52] sm:$0x1]
    %v55 = vld [vmem:[#allocation5 + $0x53] sm:$0x1]
    %v56 = vld [vmem:[#allocation5 + $0x54] sm:$0x1]
    %v57 = vld [vmem:[#allocation5 + $0x55] sm:$0x1]
    %v58 = vld [vmem:[#allocation5 + $0x56] sm:$0x1]
    %v59 = vld [vmem:[#allocation5 + $0x57] sm:$0x1]
    %v60 = vlaneseq
    %v61 = vshrl.u32 %v60, 7
    %v62 = vsub.s32 0, %v61
    %v63 = vrot.slane %v52, %v62
    %vm64 = vcmask 130048
    %v66 = vsel %vm64, %v40, 0
    %v69 = vsel %vm64, %v41, 0
    %71 = vmatprep.subr.mxu0 0.0
    %72 = vmatpush1.msra.mxu0 %v42
    %73 = vmatprep.subr.mxu0 0.0
    %74 = vmatpush1.msra.mxu0 %v43
    %75 = vmatprep.subr.mxu0 0.0
    %76 = vmatpush1.msra.mxu0 0.0
    %77 = vmatprep.subr.mxu0 0.0
    %78 = vmatpush1.msra.mxu0 0.0
    %79 = vmatprep.subr.mxu0 0.0
    %80 = vmatpush1.msra.mxu0 0.0
    %81 = vmatprep.subr.mxu0 0.0
    %82 = vmatpush1.msra.mxu0 0.0
    %83 = vmatprep.subr.mxu0 0.0
    %84 = vmatpush1.msra.mxu0 0.0
    %85 = vmatprep.subr.mxu0 0.0
    %86 = vmatpush1.msra.mxu0 0.0
    %87 = vmatprep.subr.mxu0 0.0
    %88 = vmatpush1.msra.mxu0 0.0
    %89 = vmatprep.subr.mxu0 0.0
    %90 = vmatpush1.msra.mxu0 0.0
    %91 = vmatprep.subr.mxu0 0.0
    %92 = vmatpush1.msra.mxu0 0.0
    %93 = vmatprep.subr.mxu0 0.0
    %94 = vmatpush1.msra.mxu0 0.0
    %95 = vmatprep.subr.mxu0 0.0
    %96 = vmatpush1.msra.mxu0 0.0
    %97 = vmatprep.subr.mxu0 0.0
    %98 = vmatpush1.msra.mxu0 0.0
    %99 = vmatprep.subr.mxu0 0.0
    %100 = vmatpush1.msra.mxu0 0.0
    %101 = vmatprep.subr.mxu0 0.0
    %102 = vmatpush1.msra.mxu0 0.0
    %103 = vmatprep.subr.mxu0 0.0
    %104 = vmatpush1.msra.mxu0 0.0
    %105 = vmatprep.subr.mxu0 0.0
    %106 = vmatpush1.msra.mxu0 0.0
    %107 = vmatprep.subr.mxu0 0.0
    %108 = vmatpush1.msra.mxu0 0.0
    %109 = vmatprep.subr.mxu0 0.0
    %110 = vmatpush1.msra.mxu0 0.0
    %111 = vmatprep.subr.mxu0 0.0
    %112 = vmatpush1.msra.mxu0 0.0
    %113 = vmatprep.subr.mxu0 0.0
    %114 = vmatpush1.msra.mxu0 0.0
    %115 = vmatprep.subr.mxu0 0.0
    %116 = vmatpush1.msra.mxu0 0.0
    %117 = vmatprep.subr.mxu0 0.0
    %118 = vmatpush1.msra.mxu0 0.0
    %119 = vmatprep.subr.mxu0 0.0
    %120 = vmatpush1.msra.mxu0 0.0
    %121 = vmatprep.subr.mxu0 0.0
    %122 = vmatpush1.msra.mxu0 0.0
    %123 = vmatprep.subr.mxu0 0.0
    %124 = vmatpush1.msra.mxu0 0.0
    %125 = vmatprep.subr.mxu0 0.0
    %126 = vmatpush1.msra.mxu0 0.0
    %127 = vmatprep.subr.mxu0 0.0
    %128 = vmatpush1.msra.mxu0 0.0
    %129 = vmatprep.subr.mxu0 0.0
    %130 = vmatpush1.msra.mxu0 0.0
    %131 = vmatprep.subr.mxu0 0.0
    %132 = vmatpush1.msra.mxu0 0.0
    %133 = vmatprep.subr.mxu0 0.0
    %134 = vmatpush1.msra.mxu0 0.0
    %135 = vmatprep.mubr.f32.mxu0 0.0
    %136 = vmatmul.mubr.f32.gmra.mrb[0].mxu0 %v66
    %v137 = vpop.f32.mrb[0].mxu0
    %v138 = vadd.f32 %v63, %v137
    %v139 = vpop.f32.mrb[0].mxu0
    %140 = vmatprep.mubr.f32.mxu0 0.0
    %141 = vmatmul.mubr.f32.gmra.mrb[0].mxu0 %v69
    %v142 = vpop.f32.mrb[0].mxu0
    %v143 = vadd.f32 %v63, %v142
    %v144 = vpop.f32.mrb[0].mxu0
    %145 = vdwg.mxu0
    %v146 = vmul.f32 %v138, 0.25
    %v147 = vmul.f32 %v143, 0.25
    %150 = vrot.lane.b32.xlu0 %v138, 112
    %v151 = vpop.permute.xlu0 %150
    %152 = vrot.lane.b32.xlu0 %v143, 112
    %v153 = vpop.permute.xlu0 %152
    %v155 = vsel %vm64, %v146, 0
    %v158 = vsel %vm64, %v147, 0
    %v160 = vsel %vm64, %v151, 0
    %v162 = vsel %vm64, %v153, 0
    %164 = vmatprep.subr.mxu0 0.0
    %165 = vmatpush1.xpose.msra.mxu0 %v160
    %166 = vmatprep.subr.mxu0 0.0
    %167 = vmatpush1.xpose.msra.mxu0 %v162
    %168 = vmatprep.subr.mxu0 0.0
    %169 = vmatpush1.xpose.msra.mxu0 0.0
    %170 = vmatprep.subr.mxu0 0.0
    %171 = vmatpush1.xpose.msra.mxu0 0.0
    %172 = vmatprep.subr.mxu0 0.0
    %173 = vmatpush1.xpose.msra.mxu0 0.0
    %174 = vmatprep.subr.mxu0 0.0
    %175 = vmatpush1.xpose.msra.mxu0 0.0
    %176 = vmatprep.subr.mxu0 0.0
    %177 = vmatpush1.xpose.msra.mxu0 0.0
    %178 = vmatprep.subr.mxu0 0.0
    %179 = vmatpush1.xpose.msra.mxu0 0.0
    %180 = vmatprep.subr.mxu0 0.0
    %181 = vmatpush1.xpose.msra.mxu0 0.0
    %182 = vmatprep.subr.mxu0 0.0
    %183 = vmatpush1.xpose.msra.mxu0 0.0
    %184 = vmatprep.subr.mxu0 0.0
    %185 = vmatpush1.xpose.msra.mxu0 0.0
    %186 = vmatprep.subr.mxu0 0.0
    %187 = vmatpush1.xpose.msra.mxu0 0.0
    %188 = vmatprep.subr.mxu0 0.0
    %189 = vmatpush1.xpose.msra.mxu0 0.0
    %190 = vmatprep.subr.mxu0 0.0
    %191 = vmatpush1.xpose.msra.mxu0 0.0
    %192 = vmatprep.subr.mxu0 0.0
    %193 = vmatpush1.xpose.msra.mxu0 0.0
    %194 = vmatprep.subr.mxu0 0.0
    %195 = vmatpush1.xpose.msra.mxu0 0.0
    %196 = vmatprep.subr.mxu0 0.0
    %197 = vmatpush1.xpose.msra.mxu0 0.0
    %198 = vmatprep.subr.mxu0 0.0
    %199 = vmatpush1.xpose.msra.mxu0 0.0
    %200 = vmatprep.subr.mxu0 0.0
    %201 = vmatpush1.xpose.msra.mxu0 0.0
    %202 = vmatprep.subr.mxu0 0.0
    %203 = vmatpush1.xpose.msra.mxu0 0.0
    %204 = vmatprep.subr.mxu0 0.0
    %205 = vmatpush1.xpose.msra.mxu0 0.0
    %206 = vmatprep.subr.mxu0 0.0
    %207 = vmatpush1.xpose.msra.mxu0 0.0
    %208 = vmatprep.subr.mxu0 0.0
    %209 = vmatpush1.xpose.msra.mxu0 0.0
    %210 = vmatprep.subr.mxu0 0.0
    %211 = vmatpush1.xpose.msra.mxu0 0.0
    %212 = vmatprep.subr.mxu0 0.0
    %213 = vmatpush1.xpose.msra.mxu0 0.0
    %214 = vmatprep.subr.mxu0 0.0
    %215 = vmatpush1.xpose.msra.mxu0 0.0
    %216 = vmatprep.subr.mxu0 0.0
    %217 = vmatpush1.xpose.msra.mxu0 0.0
    %218 = vmatprep.subr.mxu0 0.0
    %219 = vmatpush1.xpose.msra.mxu0 0.0
    %220 = vmatprep.subr.mxu0 0.0
    %221 = vmatpush1.xpose.msra.mxu0 0.0
    %222 = vmatprep.subr.mxu0 0.0
    %223 = vmatpush1.xpose.msra.mxu0 0.0
    %224 = vmatprep.subr.mxu0 0.0
    %225 = vmatpush1.xpose.msra.mxu0 0.0
    %226 = vmatprep.subr.mxu0 0.0
    %227 = vmatpush1.xpose.msra.mxu0 0.0
    %228 = vmatprep.mubr.f32.mxu0 0.0
    %229 = vmatmul.mubr.f32.gmra.mrb[0].mxu0 %v155
    %v230 = vpop.f32.mrb[0].mxu0
    %v231 = vadd.f32 0.0, %v230
    %v232 = vpop.f32.mrb[0].mxu0
    %233 = vmatprep.mubr.f32.mxu0 0.0
    %234 = vmatmul.mubr.f32.gmra.mrb[0].mxu0 %v158
    %v235 = vpop.f32.mrb[0].mxu0
    %v236 = vadd.f32 0.0, %v235
    %v237 = vpop.f32.mrb[0].mxu0
    %238 = vdwg.mxu0
    %v239 = vlaneseq
    %v240 = vshrl.u32 %v239, 7
    %v241 = vadd.s32 %v240, 8
    %vm242 = vcmp.lt.s32.totalorder %v240, 0
    %v243 = vsub.s32 0, %v240
    %v244 = vsel %vm242, %v243, %v240
    %v245 = vshrl.u32 %v244, 1
    %v246 = vand.u32 %v244, 1
    %v247 = vsub.s32 0, %v246
    %v248 = vsel %vm242, %v247, %v246
    %vm249 = vcmp.lt.s32.totalorder %v241, 0
    %v250 = vsub.s32 0, %v241
    %v251 = vsel %vm249, %v250, %v241
    %v252 = vshrl.u32 %v251, 1
    %v253 = vand.u32 %v251, 1
    %v254 = vsub.s32 0, %v253
    %v255 = vsel %vm249, %v254, %v253
    %vm256 = vcmp.ne.s32.totalorder %v248, 0
    %vm257 = vcmp.ne.s32.totalorder %v255, 0
    %vm258 = vcmp.lt.s32.totalorder %v248, 0
    %vm259 = vcmp.lt.s32.totalorder %v255, 0
    %vm260 = vmand %vm258, %vm256
    %vm261 = vmand %vm259, %vm257
    %v262 = vadd.s32 %v248, 2
    %v263 = vadd.s32 %v255, 2
    %v264 = vsel %vm260, %v262, %v248
    %v265 = vsel %vm261, %v263, %v255
    %v266 = vlaneseq
    %v267 = vand.u32 %v266, 127
    %vm268 = vcmp.lt.s32.totalorder %v267, 0
    %v269 = vsub.s32 0, %v267
    %v270 = vsel %vm268, %v269, %v267
    %v271 = vshrl.u32 %v270, 1
    %v272 = vand.u32 %v270, 1
    %v273 = vsub.s32 0, %v272
    %v274 = vsel %vm268, %v273, %v272
    %vm275 = vcmp.ne.s32.totalorder %v274, 0
    %vm276 = vcmp.lt.s32.totalorder %v274, 0
    %vm277 = vmand %vm276, %vm275
    %v278 = vadd.s32 %v274, 2
    %v279 = vsel %vm277, %v278, %v274
    %vm280 = vcmp.eq.s32.totalorder %v264, %v279
    %vm281 = vcmp.eq.s32.totalorder %v265, %v279
    %v282 = vsel %vm280, %v231, -1e+30
    %v283 = vsel %vm281, %v236, -1e+30
    %v284 = vsel %vm64, %v282, -inf
    %285 = vmax.xlane.f32.xlu0 %v284
    %v286 = vpop.xlane.xlu0 %285
    %v287 = vsel %vm64, %v283, -inf
    %288 = vmax.xlane.f32.xlu0 %v287
    %v289 = vpop.xlane.xlu0 %288
    %v290 = vsub.f32 %v282, %v286
    %v291 = vsub.f32 %v283, %v289
    %v292 = vmul.f32 %v290, 1.442695
    %v293 = vpow.pop %v292
    %v294 = vmul.f32 %v291, 1.442695
    %v295 = vpow.pop %v294
    %v296 = vsel %vm64, %v293, 0.0
    %297 = vadd.xlane.f32.xlu0 %v296
    %v298 = vpop.xlane.xlu0 %297
    %v299 = vsel %vm64, %v295, 0.0
    %300 = vadd.xlane.f32.xlu0 %v299
    %v301 = vpop.xlane.xlu0 %300
    %v302 = vrcp.pop %v298
    %v303 = vrcp.pop %v301
    %v304 = vmul.f32 %v293, %v302
    %v305 = vmul.f32 %v295, %v303
    %306 = vrot.lane.b32.xlu0 %v138, 96
    %v307 = vpop.permute.xlu0 %306
    %308 = vrot.lane.b32.xlu0 %v143, 96
    %v309 = vpop.permute.xlu0 %308
    %v313 = vsel %vm64, %v304, 0
    %v316 = vsel %vm64, %v305, 0
    %318 = vmatprep.subr.mxu0 0.0
    %319 = vmatpush1.msra.mxu0 %v307
    %320 = vmatprep.subr.mxu0 0.0
    %321 = vmatpush1.msra.mxu0 %v309
    %322 = vmatprep.subr.mxu0 0.0
    %323 = vmatpush1.msra.mxu0 0.0
    %324 = vmatprep.subr.mxu0 0.0
    %325 = vmatpush1.msra.mxu0 0.0
    %326 = vmatprep.subr.mxu0 0.0
    %327 = vmatpush1.msra.mxu0 0.0
    %328 = vmatprep.subr.mxu0 0.0
    %329 = vmatpush1.msra.mxu0 0.0
    %330 = vmatprep.subr.mxu0 0.0
    %331 = vmatpush1.msra.mxu0 0.0
    %332 = vmatprep.subr.mxu0 0.0
    %333 = vmatpush1.msra.mxu0 0.0
    %334 = vmatprep.subr.mxu0 0.0
    %335 = vmatpush1.msra.mxu0 0.0
    %336 = vmatprep.subr.mxu0 0.0
    %337 = vmatpush1.msra.mxu0 0.0
    %338 = vmatprep.subr.mxu0 0.0
    %339 = vmatpush1.msra.mxu0 0.0
    %340 = vmatprep.subr.mxu0 0.0
    %341 = vmatpush1.msra.mxu0 0.0
    %342 = vmatprep.subr.mxu0 0.0
    %343 = vmatpush1.msra.mxu0 0.0
    %344 = vmatprep.subr.mxu0 0.0
    %345 = vmatpush1.msra.mxu0 0.0
    %346 = vmatprep.subr.mxu0 0.0
    %347 = vmatpush1.msra.mxu0 0.0
    %348 = vmatprep.subr.mxu0 0.0
    %349 = vmatpush1.msra.mxu0 0.0
    %350 = vmatprep.subr.mxu0 0.0
    %351 = vmatpush1.msra.mxu0 0.0
    %352 = vmatprep.subr.mxu0 0.0
    %353 = vmatpush1.msra.mxu0 0.0
    %354 = vmatprep.subr.mxu0 0.0
    %355 = vmatpush1.msra.mxu0 0.0
    %356 = vmatprep.subr.mxu0 0.0
    %357 = vmatpush1.msra.mxu0 0.0
    %358 = vmatprep.subr.mxu0 0.0
    %359 = vmatpush1.msra.mxu0 0.0
    %360 = vmatprep.subr.mxu0 0.0
    %361 = vmatpush1.msra.mxu0 0.0
    %362 = vmatprep.subr.mxu0 0.0
    %363 = vmatpush1.msra.mxu0 0.0
    %364 = vmatprep.subr.mxu0 0.0
    %365 = vmatpush1.msra.mxu0 0.0
    %366 = vmatprep.subr.mxu0 0.0
    %367 = vmatpush1.msra.mxu0 0.0
    %368 = vmatprep.subr.mxu0 0.0
    %369 = vmatpush1.msra.mxu0 0.0
    %370 = vmatprep.subr.mxu0 0.0
    %371 = vmatpush1.msra.mxu0 0.0
    %372 = vmatprep.subr.mxu0 0.0
    %373 = vmatpush1.msra.mxu0 0.0
    %374 = vmatprep.subr.mxu0 0.0
    %375 = vmatpush1.msra.mxu0 0.0
    %376 = vmatprep.subr.mxu0 0.0
    %377 = vmatpush1.msra.mxu0 0.0
    %378 = vmatprep.subr.mxu0 0.0
    %379 = vmatpush1.msra.mxu0 0.0
    %380 = vmatprep.subr.mxu0 0.0
    %381 = vmatpush1.msra.mxu0 0.0
    %382 = vmatprep.mubr.f32.mxu0 0.0
    %383 = vmatmul.mubr.f32.gmra.mrb[0].mxu0 %v313
    %v384 = vpop.f32.mrb[0].mxu0
    %v385 = vadd.f32 0.0, %v384
    %v386 = vpop.f32.mrb[0].mxu0
    %387 = vmatprep.mubr.f32.mxu0 0.0
    %388 = vmatmul.mubr.f32.gmra.mrb[0].mxu0 %v316
    %v389 = vpop.f32.mrb[0].mxu0
    %v390 = vadd.f32 0.0, %v389
    %v391 = vpop.f32.mrb[0].mxu0
    %392 = vdwg.mxu0
    %v393 = vlaneseq
    %v394 = vshrl.u32 %v393, 7
    %v395 = vsub.s32 0, %v394
    %v396 = vrot.slane %v53, %v395
    %v398 = vsel %vm64, %v385, 0
    %v401 = vsel %vm64, %v390, 0
    %403 = vmatprep.subr.mxu0 0.0
    %404 = vmatpush1.msra.mxu0 %v44
    %405 = vmatprep.subr.mxu0 0.0
    %406 = vmatpush1.msra.mxu0 %v45
    %407 = vmatprep.subr.mxu0 0.0
    %408 = vmatpush1.msra.mxu0 0.0
    %409 = vmatprep.subr.mxu0 0.0
    %410 = vmatpush1.msra.mxu0 0.0
    %411 = vmatprep.subr.mxu0 0.0
    %412 = vmatpush1.msra.mxu0 0.0
    %413 = vmatprep.subr.mxu0 0.0
    %414 = vmatpush1.msra.mxu0 0.0
    %415 = vmatprep.subr.mxu0 0.0
    %416 = vmatpush1.msra.mxu0 0.0
    %417 = vmatprep.subr.mxu0 0.0
    %418 = vmatpush1.msra.mxu0 0.0
    %419 = vmatprep.subr.mxu0 0.0
    %420 = vmatpush1.msra.mxu0 0.0
    %421 = vmatprep.subr.mxu0 0.0
    %422 = vmatpush1.msra.mxu0 0.0
    %423 = vmatprep.subr.mxu0 0.0
    %424 = vmatpush1.msra.mxu0 0.0
    %425 = vmatprep.subr.mxu0 0.0
    %426 = vmatpush1.msra.mxu0 0.0
    %427 = vmatprep.subr.mxu0 0.0
    %428 = vmatpush1.msra.mxu0 0.0
    %429 = vmatprep.subr.mxu0 0.0
    %430 = vmatpush1.msra.mxu0 0.0
    %431 = vmatprep.subr.mxu0 0.0
    %432 = vmatpush1.msra.mxu0 0.0
    %433 = vmatprep.subr.mxu0 0.0
    %434 = vmatpush1.msra.mxu0 0.0
    %435 = vmatprep.subr.mxu0 0.0
    %436 = vmatpush1.msra.mxu0 0.0
    %437 = vmatprep.subr.mxu0 0.0
    %438 = vmatpush1.msra.mxu0 0.0
    %439 = vmatprep.subr.mxu0 0.0
    %440 = vmatpush1.msra.mxu0 0.0
    %441 = vmatprep.subr.mxu0 0.0
    %442 = vmatpush1.msra.mxu0 0.0
    %443 = vmatprep.subr.mxu0 0.0
    %444 = vmatpush1.msra.mxu0 0.0
    %445 = vmatprep.subr.mxu0 0.0
    %446 = vmatpush1.msra.mxu0 0.0
    %447 = vmatprep.subr.mxu0 0.0
    %448 = vmatpush1.msra.mxu0 0.0
    %449 = vmatprep.subr.mxu0 0.0
    %450 = vmatpush1.msra.mxu0 0.0
    %451 = vmatprep.subr.mxu0 0.0
    %452 = vmatpush1.msra.mxu0 0.0
    %453 = vmatprep.subr.mxu0 0.0
    %454 = vmatpush1.msra.mxu0 0.0
    %455 = vmatprep.subr.mxu0 0.0
    %456 = vmatpush1.msra.mxu0 0.0
    %457 = vmatprep.subr.mxu0 0.0
    %458 = vmatpush1.msra.mxu0 0.0
    %459 = vmatprep.subr.mxu0 0.0
    %460 = vmatpush1.msra.mxu0 0.0
    %461 = vmatprep.subr.mxu0 0.0
    %462 = vmatpush1.msra.mxu0 0.0
    %463 = vmatprep.subr.mxu0 0.0
    %464 = vmatpush1.msra.mxu0 0.0
    %465 = vmatprep.subr.mxu0 0.0
    %466 = vmatpush1.msra.mxu0 0.0
    %467 = vmatprep.mubr.f32.mxu0 0.0
    %468 = vmatmul.mubr.f32.gmra.mrb[0].mxu0 %v398
    %v469 = vpop.f32.mrb[0].mxu0
    %v470 = vadd.f32 %v396, %v469
    %v471 = vpop.f32.mrb[0].mxu0
    %472 = vmatprep.mubr.f32.mxu0 0.0
    %473 = vmatmul.mubr.f32.gmra.mrb[0].mxu0 %v401
    %v474 = vpop.f32.mrb[0].mxu0
    %v475 = vadd.f32 %v396, %v474
    %v476 = vpop.f32.mrb[0].mxu0
    %477 = vdwg.mxu0
    %v478 = vadd.f32 %v40, %v470
    %v479 = vadd.f32 %v41, %v475
    %v480 = vsel %vm64, %v478, 0.0
    %481 = vadd.xlane.f32.xlu0 %v480
    %v482 = vpop.xlane.xlu0 %481
    %v483 = vsel %vm64, %v479, 0.0
    %484 = vadd.xlane.f32.xlu0 %v483
    %v485 = vpop.xlane.xlu0 %484
    %v486 = vrcp.pop 16.0
    %v487 = vmul.f32 %v482, %v486
    %v488 = vmul.f32 %v485, %v486
    %v489 = vmul.f32 %v478, %v478
    %v490 = vmul.f32 %v479, %v479
    %v491 = vsel %vm64, %v489, 0.0
    %492 = vadd.xlane.f32.xlu0 %v491
    %v493 = vpop.xlane.xlu0 %492
    %v494 = vsel %vm64, %v490, 0.0
    %495 = vadd.xlane.f32.xlu0 %v494
    %v496 = vpop.xlane.xlu0 %495
    %v497 = vmul.f32 %v493, %v486
    %v498 = vmul.f32 %v496, %v486
    %v499 = vmul.f32 %v487, %v487
    %v500 = vmul.f32 %v488, %v488
    %v501 = vsub.f32 %v497, %v499
    %v502 = vsub.f32 %v498, %v500
    %v503 = vsub.f32 %v478, %v487
    %v504 = vsub.f32 %v479, %v488
    %v505 = vadd.f32 %v501, 1e-05
    %v506 = vadd.f32 %v502, 1e-05
    %v507 = vrsqrt.pop %v505
    %v508 = vrsqrt.pop %v506
    %v509 = vmul.f32 %v503, %v507
    %v510 = vmul.f32 %v504, %v508
    %v511 = vlaneseq
    %v512 = vshrl.u32 %v511, 7
    %v513 = vsub.s32 0, %v512
    %v514 = vrot.slane %v54, %v513
    %v515 = vmul.f32 %v509, %v514
    %v516 = vmul.f32 %v510, %v514
    %v517 = vlaneseq
    %v518 = vshrl.u32 %v517, 7
    %v519 = vsub.s32 0, %v518
    %v520 = vrot.slane %v55, %v519
    %v521 = vadd.f32 %v515, %v520
    %v522 = vadd.f32 %v516, %v520
    %v523 = vlaneseq
    %v524 = vshrl.u32 %v523, 7
    %v525 = vsub.s32 0, %v524
    %v526 = vrot.slane %v56, %v525
    %v528 = vsel %vm64, %v521, 0
    %v531 = vsel %vm64, %v522, 0
    %533 = vmatprep.subr.mxu0 0.0
    %534 = vmatpush1.msra.mxu0 %v46
    %535 = vmatprep.subr.mxu0 0.0
    %536 = vmatpush1.msra.mxu0 %v47
    %537 = vmatprep.subr.mxu0 0.0
    %538 = vmatpush1.msra.mxu0 0.0
    %539 = vmatprep.subr.mxu0 0.0
    %540 = vmatpush1.msra.mxu0 0.0
    %541 = vmatprep.subr.mxu0 0.0
    %542 = vmatpush1.msra.mxu0 0.0
    %543 = vmatprep.subr.mxu0 0.0
    %544 = vmatpush1.msra.mxu0 0.0
    %545 = vmatprep.subr.mxu0 0.0
    %546 = vmatpush1.msra.mxu0 0.0
    %547 = vmatprep.subr.mxu0 0.0
    %548 = vmatpush1.msra.mxu0 0.0
    %549 = vmatprep.subr.mxu0 0.0
    %550 = vmatpush1.msra.mxu0 0.0
    %551 = vmatprep.subr.mxu0 0.0
    %552 = vmatpush1.msra.mxu0 0.0
    %553 = vmatprep.subr.mxu0 0.0
    %554 = vmatpush1.msra.mxu0 0.0
    %555 = vmatprep.subr.mxu0 0.0
    %556 = vmatpush1.msra.mxu0 0.0
    %557 = vmatprep.subr.mxu0 0.0
    %558 = vmatpush1.msra.mxu0 0.0
    %559 = vmatprep.subr.mxu0 0.0
    %560 = vmatpush1.msra.mxu0 0.0
    %561 = vmatprep.subr.mxu0 0.0
    %562 = vmatpush1.msra.mxu0 0.0
    %563 = vmatprep.subr.mxu0 0.0
    %564 = vmatpush1.msra.mxu0 0.0
    %565 = vmatprep.subr.mxu0 0.0
    %566 = vmatpush1.msra.mxu0 0.0
    %567 = vmatprep.subr.mxu0 0.0
    %568 = vmatpush1.msra.mxu0 0.0
    %569 = vmatprep.subr.mxu0 0.0
    %570 = vmatpush1.msra.mxu0 0.0
    %571 = vmatprep.subr.mxu0 0.0
    %572 = vmatpush1.msra.mxu0 0.0
    %573 = vmatprep.subr.mxu0 0.0
    %574 = vmatpush1.msra.mxu0 0.0
    %575 = vmatprep.subr.mxu0 0.0
    %576 = vmatpush1.msra.mxu0 0.0
    %577 = vmatprep.subr.mxu0 0.0
    %578 = vmatpush1.msra.mxu0 0.0
    %579 = vmatprep.subr.mxu0 0.0
    %580 = vmatpush1.msra.mxu0 0.0
    %581 = vmatprep.subr.mxu0 0.0
    %582 = vmatpush1.msra.mxu0 0.0
    %583 = vmatprep.subr.mxu0 0.0
    %584 = vmatpush1.msra.mxu0 0.0
    %585 = vmatprep.subr.mxu0 0.0
    %586 = vmatpush1.msra.mxu0 0.0
    %587 = vmatprep.subr.mxu0 0.0
    %588 = vmatpush1.msra.mxu0 0.0
    %589 = vmatprep.subr.mxu0 0.0
    %590 = vmatpush1.msra.mxu0 0.0
    %591 = vmatprep.subr.mxu0 0.0
    %592 = vmatpush1.msra.mxu0 0.0
    %593 = vmatprep.subr.mxu0 0.0
    %594 = vmatpush1.msra.mxu0 0.0
    %595 = vmatprep.subr.mxu0 0.0
    %596 = vmatpush1.msra.mxu0 0.0
    %597 = vmatprep.mubr.f32.mxu0 0.0
    %598 = vmatmul.mubr.f32.gmra.mrb[0].mxu0 %v528
    %v599 = vpop.f32.mrb[0].mxu0
    %v600 = vadd.f32 %v526, %v599
    %v601 = vpop.f32.mrb[0].mxu0
    %602 = vmatprep.mubr.f32.mxu0 0.0
    %603 = vmatmul.mubr.f32.gmra.mrb[0].mxu0 %v531
    %v604 = vpop.f32.mrb[0].mxu0
    %v605 = vadd.f32 %v526, %v604
    %v606 = vpop.f32.mrb[0].mxu0
    %607 = vdwg.mxu0
    %v608 = vlaneseq
    %v609 = vshrl.u32 %v608, 7
    %v610 = vsub.s32 0, %v609
    %v611 = vrot.slane %v57, %v610
    %vm612 = vcmask 261120
    %v614 = vsel %vm612, %v600, 0
    %v617 = vsel %vm612, %v605, 0
    %619 = vmatprep.subr.mxu0 0.0
    %620 = vmatpush1.msra.mxu0 %v48
    %621 = vmatprep.subr.mxu0 0.0
    %622 = vmatpush1.msra.mxu0 %v49
    %623 = vmatprep.subr.mxu0 0.0
    %624 = vmatpush1.msra.mxu0 %v50
    %625 = vmatprep.subr.mxu0 0.0
    %626 = vmatpush1.msra.mxu0 %v51
    %627 = vmatprep.subr.mxu0 0.0
    %628 = vmatpush1.msra.mxu0 0.0
    %629 = vmatprep.subr.mxu0 0.0
    %630 = vmatpush1.msra.mxu0 0.0
    %631 = vmatprep.subr.mxu0 0.0
    %632 = vmatpush1.msra.mxu0 0.0
    %633 = vmatprep.subr.mxu0 0.0
    %634 = vmatpush1.msra.mxu0 0.0
    %635 = vmatprep.subr.mxu0 0.0
    %636 = vmatpush1.msra.mxu0 0.0
    %637 = vmatprep.subr.mxu0 0.0
    %638 = vmatpush1.msra.mxu0 0.0
    %639 = vmatprep.subr.mxu0 0.0
    %640 = vmatpush1.msra.mxu0 0.0
    %641 = vmatprep.subr.mxu0 0.0
    %642 = vmatpush1.msra.mxu0 0.0
    %643 = vmatprep.subr.mxu0 0.0
    %644 = vmatpush1.msra.mxu0 0.0
    %645 = vmatprep.subr.mxu0 0.0
    %646 = vmatpush1.msra.mxu0 0.0
    %647 = vmatprep.subr.mxu0 0.0
    %648 = vmatpush1.msra.mxu0 0.0
    %649 = vmatprep.subr.mxu0 0.0
    %650 = vmatpush1.msra.mxu0 0.0
    %651 = vmatprep.subr.mxu0 0.0
    %652 = vmatpush1.msra.mxu0 0.0
    %653 = vmatprep.subr.mxu0 0.0
    %654 = vmatpush1.msra.mxu0 0.0
    %655 = vmatprep.subr.mxu0 0.0
    %656 = vmatpush1.msra.mxu0 0.0
    %657 = vmatprep.subr.mxu0 0.0
    %658 = vmatpush1.msra.mxu0 0.0
    %659 = vmatprep.subr.mxu0 0.0
    %660 = vmatpush1.msra.mxu0 0.0
    %661 = vmatprep.subr.mxu0 0.0
    %662 = vmatpush1.msra.mxu0 0.0
    %663 = vmatprep.subr.mxu0 0.0
    %664 = vmatpush1.msra.mxu0 0.0
    %665 = vmatprep.subr.mxu0 0.0
    %666 = vmatpush1.msra.mxu0 0.0
    %667 = vmatprep.subr.mxu0 0.0
    %668 = vmatpush1.msra.mxu0 0.0
    %669 = vmatprep.subr.mxu0 0.0
    %670 = vmatpush1.msra.mxu0 0.0
    %671 = vmatprep.subr.mxu0 0.0
    %672 = vmatpush1.msra.mxu0 0.0
    %673 = vmatprep.subr.mxu0 0.0
    %674 = vmatpush1.msra.mxu0 0.0
    %675 = vmatprep.subr.mxu0 0.0
    %676 = vmatpush1.msra.mxu0 0.0
    %677 = vmatprep.subr.mxu0 0.0
    %678 = vmatpush1.msra.mxu0 0.0
    %679 = vmatprep.subr.mxu0 0.0
    %680 = vmatpush1.msra.mxu0 0.0
    %681 = vmatprep.subr.mxu0 0.0
    %682 = vmatpush1.msra.mxu0 0.0
    %683 = vmatprep.mubr.f32.mxu0 0.0
    %684 = vmatmul.mubr.f32.gmra.mrb[0].mxu0 %v614
    %v685 = vpop.f32.mrb[0].mxu0
    %v686 = vadd.f32 %v611, %v685
    %v687 = vpop.f32.mrb[0].mxu0
    %688 = vmatprep.mubr.f32.mxu0 0.0
    %689 = vmatmul.mubr.f32.gmra.mrb[0].mxu0 %v617
    %v690 = vpop.f32.mrb[0].mxu0
    %v691 = vadd.f32 %v611, %v690
    %v692 = vpop.f32.mrb[0].mxu0
    %693 = vdwg.mxu0
    %v694 = vtanh.pop %v686
    %v695 = vtanh.pop %v691
    %v696 = vadd.f32 %v521, %v694
    %v697 = vadd.f32 %v522, %v695
    %v698 = vsel %vm64, %v696, 0.0
    %699 = vadd.xlane.f32.xlu0 %v698
    %v700 = vpop.xlane.xlu0 %699
    %v701 = vsel %vm64, %v697, 0.0
    %702 = vadd.xlane.f32.xlu0 %v701
    %v703 = vpop.xlane.xlu0 %702
    %v704 = vmul.f32 %v700, %v486
    %v705 = vmul.f32 %v703, %v486
    %v706 = vmul.f32 %v696, %v696
    %v707 = vmul.f32 %v697, %v697
    %v708 = vsel %vm64, %v706, 0.0
    %709 = vadd.xlane.f32.xlu0 %v708
    %v710 = vpop.xlane.xlu0 %709
    %v711 = vsel %vm64, %v707, 0.0
    %712 = vadd.xlane.f32.xlu0 %v711
    %v713 = vpop.xlane.xlu0 %712
    %v714 = vmul.f32 %v710, %v486
    %v715 = vmul.f32 %v713, %v486
    %v716 = vmul.f32 %v704, %v704
    %v717 = vmul.f32 %v705, %v705
    %v718 = vsub.f32 %v714, %v716
    %v719 = vsub.f32 %v715, %v717
    %v720 = vsub.f32 %v696, %v704
    %v721 = vsub.f32 %v697, %v705
    %v722 = vadd.f32 %v718, 1e-05
    %v723 = vadd.f32 %v719, 1e-05
    %v724 = vrsqrt.pop %v722
    %v725 = vrsqrt.pop %v723
    %v726 = vmul.f32 %v720, %v724
    %v727 = vmul.f32 %v721, %v725
    %v728 = vlaneseq
    %v729 = vshrl.u32 %v728, 7
    %v730 = vsub.s32 0, %v729
    %v731 = vrot.slane %v58, %v730
    %v732 = vmul.f32 %v726, %v731
    %v733 = vmul.f32 %v727, %v731
    %v734 = vlaneseq
    %v735 = vshrl.u32 %v734, 7
    %v736 = vsub.s32 0, %v735
    %v737 = vrot.slane %v59, %v736
    %v738 = vadd.f32 %v732, %v737
    %v739 = vadd.f32 %v733, %v737
    %740 = vst.msk [vmem:[#allocation7] sm:$0xff] %vm64, %v738
    %741 = vst.msk [vmem:[#allocation7 + $0x8] sm:$0xff] %vm64, %v739
    // Predicated region
    $region18: #{encoder_layer_pallas.1} parent=1 // pred_check
      _
    $region19: #{encoder_layer_pallas.1} parent=1 // pred_check_branch
      %743 = sbr.rel (0) target = $region21
    $region20: #{encoder_layer_pallas.1} parent=1 // pred_region
      %s745 = ssub.s32 256, 256
      %746 = vsyncadd [#allocation4], %s745
      %s747 = sshll.u32 [#allocation7], 4
      %s748 = int_to_ptr.vmem [resolvable:$true] %s747
      %753 = dma.vmem_to_hbm [thread:$0]  %s748, 256, %s2, [#allocation4], 128, 128, 8
    $region21: #{encoder_layer_pallas.1} parent=1 // pred_fallthru
      _
    // Predicated region
    $region22: #{encoder_layer_pallas.1} parent=1 // pred_check
      _
    $region23: #{encoder_layer_pallas.1} parent=1 // pred_check_branch
      %755 = sbr.rel (0) target = $region25
    $region24: #{encoder_layer_pallas.1} parent=1 // pred_region
      %756 = dma.done [#allocation4], 256
    $region25: #{encoder_layer_pallas.1} parent=1 // pred_fallthru
      _
    %757 = vsyncpa [#allocation3], 1
    %758 = vsyncpa [#allocation6], 1
    %759 = vsyncpa [#allocation4], 1

</llo_original>
